<compile_context>
chip_gen: v5e
topology: v5e:2x2
jax: 0.10.0
libtpu: 0.0.40
codegen_flags: <defaults>
</compile_context>

<pallas_src>
import jax
import jax.numpy as jnp
import numpy as np
from jax.experimental import pallas as pl
from jax.experimental.pallas import tpu as pltpu


def _make_se_kernel(C, H, W, HWp, B_blk, out_dtype):
    HW = H * W
    BC = B_blk * C
    has_pad = (HWp != HW)
    # The flattened (B_blk*C, HWp) view is only layout-free when C % 8 == 0.
    mxu_reduce = (C % 8 == 0)

    def kernel(x_ref, ones_ref, sel_ref, w1t_ref, w2t_ref, wmask_ref,
               lbias_ref, bsp_ref, o_ref):
        x = x_ref[...].astype(jnp.float32)                     # (B_blk, C, HWp)

        # ---------------- reductions: sums on the MXU, maxes on the XLU ----------
        if mxu_reduce:
            xs = x.reshape(BC, HWp)                            # free (leading-dim merge)
            # mean over HW: every column of ones_ref is 1/(8*HW) on valid lanes.
            avg8 = jnp.dot(xs, ones_ref[...],
                           preferred_element_type=jnp.float32)        # (BC, 8)
            avg_c = jnp.sum(avg8.reshape(B_blk, C, 8), axis=2)        # (B_blk, C)
            # mean over C: block-diagonal selection matrix (entries 1/C).
            cmean = jnp.dot(sel_ref[...], xs,
                            preferred_element_type=jnp.float32)       # (B_blk, HWp)
        else:
            # TODO(synk): C not a multiple of 8 -> keep VPU/XLU reductions (the
            # flattened 2-D view would not be layout-free).
            avg_c = jnp.sum(x, axis=2) * (1.0 / HW)
            cmean = jnp.mean(x, axis=1)

        xm = (x + lbias_ref[...]) if has_pad else x            # -1e30 on padded lanes
        max_c = jnp.max(xm, axis=2)                            # (B_blk, C)   lane max
        cmax = jnp.max(x, axis=1)                              # (B_blk, HWp) sublane max

        # ---------------- channel attention MLP ----------------------------------
        s = avg_c + max_c                                      # (B_blk, C)
        h1 = jnp.maximum(
            jnp.dot(s, w1t_ref[...], preferred_element_type=jnp.float32), 0.0)
        ca = jax.nn.sigmoid(
            jnp.dot(h1, w2t_ref[...], preferred_element_type=jnp.float32))
        ca3 = ca[:, :, None]                                   # (B_blk, C, 1)

        # ---------------- spatial attention: 5x5 "same" conv as 25 rolls ---------
        m = cmean + cmax                                       # (B_blk, HWp)
        acc = jnp.full((B_blk, HWp), bsp_ref[0], dtype=jnp.float32)
        for di in range(5):
            for dj in range(5):
                off = (di - 2) * W + (dj - 2)
                shifted = pltpu.roll(m, shift=(-off) % HWp, axis=1)
                acc = acc + wmask_ref[di * 5 + dj, :] * shifted
        sa3 = jax.nn.sigmoid(acc)[:, None, :]                  # (B_blk, 1, HWp)

        # ---------------- combine: ca*x + sa*x + x = x * (1 + ca + sa) -----------
        o_ref[...] = (x * ((ca3 + 1.0) + sa3)).astype(out_dtype)

    return kernel


def _pick_b_blk(B, C, HWp, target_bytes):
    """Largest divisor of B with ~target-sized blocks, but keep >=2 grid steps
    whenever B permits (DMA/compute overlap; v7x two-TensorCore split)."""
    per_b = C * HWp * 4                       # f32 working set per sample
    cap = max(1, target_bytes // per_b)
    b_blk = 1
    for d in range(1, B + 1):
        if B % d == 0 and d <= cap:
            b_blk = d
    if B >= 2 and B // b_blk < 2:
        for d in range(b_blk - 1, 0, -1):
            if B % d == 0 and B // d >= 2:
                b_blk = d
                break
    # TODO(synk): if a single sample (C*HWp*4B x ~6 live copies) exceeds the VMEM
    # budget, a two-pass (HW-tiled reduce, then HW-tiled apply) scheme is needed.
    return b_blk


def se_module(x_nchw, w1, w2, w_sp, b_sp):
    """x_nchw: (B, C, H, W). w1: (C//4, C), w2: (C, C//4), w_sp: (5,5), b_sp: (1,)."""
    B, C, H, W = x_nchw.shape
    HW = H * W
    HWp = ((HW + 127) // 128) * 128           # lane-dense last dim
    Cr = w1.shape[0]
    in_dtype = x_nchw.dtype

    # Keep the input dtype through HBM; pad HW up to a multiple of 128 with zeros.
    x_flat = x_nchw.reshape(B, C, HW)
    if HWp != HW:
        x_flat = jnp.pad(x_flat, ((0, 0), (0, 0), (0, HWp - HW)))

    # Generation-aware tiling / VMEM budget.
    try:
        kind = jax.devices()[0].device_kind.lower()
    except Exception:
        kind = ""
    is_v7 = ("v7" in kind) or ("tpu7" in kind)
    target_bytes = (4 if is_v7 else 2) * 1024 * 1024
    vmem_limit = (48 if is_v7 else 32) * 1024 * 1024

    B_blk = _pick_b_blk(B, C, HWp, target_bytes)
    grid = (B // B_blk,)
    BC = B_blk * C

    # ----- constants built once in the wrapper (free layout plumbing) ------------
    valid = (np.arange(HWp) < HW)
    # (HWp, 8): every valid row carries 1/(8*HW); summing the 8 identical matmul
    # output columns yields exactly the mean over HW (padded rows are zero).
    ones_hw = jnp.asarray(
        np.where(valid[:, None], 1.0 / (8.0 * HW), 0.0) * np.ones((1, 8)), jnp.float32)
    # (B_blk, B_blk*C): block-diagonal rows of 1/C -> sel @ x2d = mean over C.
    sel = jnp.asarray(
        np.kron(np.eye(B_blk, dtype=np.float32),
                np.full((1, C), 1.0 / C, np.float32)), jnp.float32)
    # 25 boundary masks for "same" zero padding, pre-multiplied by the 5x5 weights.
    pos = np.arange(HWp)
    row, col = pos // W, pos % W
    ok = np.zeros((25, HWp), np.float32)
    for di in range(5):
        for dj in range(5):
            dr, dc = di - 2, dj - 2
            ok[di * 5 + dj] = (valid & (row + dr >= 0) & (row + dr < H)
                               & (col + dc >= 0) & (col + dc < W)).astype(np.float32)
    wmask = jnp.asarray(ok) * jnp.asarray(w_sp, jnp.float32).reshape(25, 1)
    # Lane bias so the HW max ignores padded lanes (unused when HWp == HW).
    lbias = jnp.asarray(np.where(valid, 0.0, -1e30), jnp.float32).reshape(1, HWp)

    w1t = jnp.asarray(w1, jnp.float32).T                       # (C, Cr)
    w2t = jnp.asarray(w2, jnp.float32).T                       # (Cr, C)
    bsp = jnp.asarray(b_sp, jnp.float32).reshape(1)

    out_flat = pl.pallas_call(
        _make_se_kernel(C, H, W, HWp, B_blk, in_dtype),
        out_shape=jax.ShapeDtypeStruct((B, C, HWp), in_dtype),
        grid_spec=pltpu.PrefetchScalarGridSpec(
            num_scalar_prefetch=0,
            grid=grid,
            in_specs=[
                pl.BlockSpec((B_blk, C, HWp), lambda b: (b, 0, 0)),     # x
                pl.BlockSpec((HWp, 8), lambda b: (0, 0)),               # HW-mean weights
                pl.BlockSpec((B_blk, BC), lambda b: (0, 0)),            # C-mean selector
                pl.BlockSpec((C, Cr), lambda b: (0, 0)),                # MLP w1^T
                pl.BlockSpec((Cr, C), lambda b: (0, 0)),                # MLP w2^T
                pl.BlockSpec((25, HWp), lambda b: (0, 0)),              # weighted conv masks
                pl.BlockSpec((1, HWp), lambda b: (0, 0)),               # pad lane bias
                pl.BlockSpec(memory_space=pltpu.MemorySpace.SMEM),      # conv bias
            ],
            out_specs=pl.BlockSpec((B_blk, C, HWp), lambda b: (b, 0, 0)),
        ),
        compiler_params=pltpu.CompilerParams(
            dimension_semantics=("parallel",),
            vmem_limit_bytes=vmem_limit),
    )(x_flat, ones_hw, sel, w1t, w2t, wmask, lbias, bsp)

    if HWp != HW:
        out_flat = out_flat[:, :, :HW]
    return out_flat.reshape(B, C, H, W)


def se_reference(x, w1, w2, w_sp, b_sp):
    """Pure-JAX reference matching the PyTorch forward."""
    avg = x.mean(axis=(2, 3))
    mx = x.max(axis=(2, 3))
    s = avg + mx                                               # (B, C)
    h = jnp.maximum(s @ w1.T, 0.0)                             # (B, Cr)
    ca = jax.nn.sigmoid(h @ w2.T)[:, :, None, None]            # (B, C, 1, 1)
    m = x.mean(axis=1, keepdims=True) + x.max(axis=1, keepdims=True)   # (B,1,H,W)
    conv = jax.lax.conv_general_dilated(
        m, w_sp.reshape(1, 1, 5, 5), window_strides=(1, 1),
        padding=((2, 2), (2, 2)),
        dimension_numbers=("NCHW", "OIHW", "NCHW")) + b_sp.reshape(1, 1, 1, 1)
    sa = jax.nn.sigmoid(conv)                                  # (B, 1, H, W)
    return ca * x + sa * x + x


if __name__ == "__main__":
    key = jax.random.PRNGKey(0)
    kx, k1, k2, k3, k4 = jax.random.split(key, 5)
    B, C, H, W = 2, 16, 16, 16
    Cr = C // 4

    x = jax.random.normal(kx, (B, C, H, W), jnp.float32)
    # deterministic synthetic parameters (shapes from the module __init__)
    w1 = jax.random.normal(k1, (Cr, C), jnp.float32) * 0.25    # Conv2d(C, C//4, 1, bias=False)
    w2 = jax.random.normal(k2, (C, Cr), jnp.float32) * 0.25    # Conv2d(C//4, C, 1, bias=False)
    # TODO(synk): the PyTorch module declares Conv2d(channel, 1, 5, padding=2) for spatial
    # attention but feeds it a 1-channel (mean+max) map, which only type-checks when
    # channel == 1; we implement the effective Conv2d(1, 1, 5, padding=2).
    w_sp = jax.random.normal(k3, (5, 5), jnp.float32) * 0.1
    b_sp = jax.random.normal(k4, (1,), jnp.float32) * 0.1

    out = jax.block_until_ready(se_module(x, w1, w2, w_sp, b_sp))

    ref = se_reference(x, w1, w2, w_sp, b_sp)
    np.testing.assert_allclose(np.asarray(out), np.asarray(ref), rtol=1e-4, atol=1e-4)
    print("KERNEL_OK")
</pallas_src>

<mosaic_0001>
module attributes {stable_mosaic.version = 11 : i64} {
  func.func @kernel(%arg0: i32, %arg1: memref<1x16x256xf32, #tpu.memory_space<vmem>>, %arg2: memref<256x8xf32, #tpu.memory_space<vmem>>, %arg3: memref<1x16xf32, #tpu.memory_space<vmem>>, %arg4: memref<16x4xf32, #tpu.memory_space<vmem>>, %arg5: memref<4x16xf32, #tpu.memory_space<vmem>>, %arg6: memref<25x256xf32, #tpu.memory_space<vmem>>, %arg7: memref<1x256xf32, #tpu.memory_space<vmem>>, %arg8: memref<1xf32, #tpu.memory_space<smem>>, %arg9: memref<1x16x256xf32, #tpu.memory_space<vmem>>) attributes {dimension_semantics = [#tpu.dimension_semantics<parallel>], iteration_bounds = array<i64: 2>, scalar_prefetch = 0 : i64, scratch_operands = 0 : i64, tpu.core_type = #tpu.core_type<tc>, window_params = [{transform_indices = @transform_0, window_bounds = array<i64: 1, 16, 256>}, {pipeline_mode = #tpu.pipeline_mode<synchronous>, transform_indices = @transform_1, window_bounds = array<i64: 256, 8>}, {pipeline_mode = #tpu.pipeline_mode<synchronous>, transform_indices = @transform_2, window_bounds = array<i64: 1, 16>}, {pipeline_mode = #tpu.pipeline_mode<synchronous>, transform_indices = @transform_3, window_bounds = array<i64: 16, 4>}, {pipeline_mode = #tpu.pipeline_mode<synchronous>, transform_indices = @transform_4, window_bounds = array<i64: 4, 16>}, {pipeline_mode = #tpu.pipeline_mode<synchronous>, transform_indices = @transform_5, window_bounds = array<i64: 25, 256>}, {pipeline_mode = #tpu.pipeline_mode<synchronous>, transform_indices = @transform_6, window_bounds = array<i64: 1, 256>}, {transform_indices = @transform_7, window_bounds = array<i64: 1>}, {transform_indices = @transform_8, window_bounds = array<i64: 1, 16, 256>}]} {
    %c0 = arith.constant 0 : index
    %c0_0 = arith.constant 0 : index
    %c0_1 = arith.constant 0 : index
    %0 = vector.load %arg1[%c0, %c0_0, %c0_1] : memref<1x16x256xf32, #tpu.memory_space<vmem>>, vector<1x16x256xf32>
    %1 = vector.shape_cast %0 : vector<1x16x256xf32> to vector<16x256xf32>
    %c0_2 = arith.constant 0 : index
    %c0_3 = arith.constant 0 : index
    %2 = vector.load %arg2[%c0_2, %c0_3] : memref<256x8xf32, #tpu.memory_space<vmem>>, vector<256x8xf32>
    %cst = arith.constant dense<0.000000e+00> : vector<16x8xf32>
    %3 = tpu.matmul %1, %2, %cst {dimension_numbers = #tpu.dot_dimension_numbers<[1], [0], [0], [1], [0, 0, 1, 1], [], []>} : vector<16x256xf32>, vector<256x8xf32>, vector<16x8xf32> -> vector<16x8xf32>
    %4 = vector.shape_cast %3 : vector<16x8xf32> to vector<1x16x8xf32>
    %cst_4 = arith.constant dense<0.000000e+00> : vector<1x16xf32>
    %5 = vector.multi_reduction <add>, %4, %cst_4 [2] : vector<1x16x8xf32> to vector<1x16xf32>
    %c0_5 = arith.constant 0 : index
    %c0_6 = arith.constant 0 : index
    %6 = vector.load %arg3[%c0_5, %c0_6] : memref<1x16xf32, #tpu.memory_space<vmem>>, vector<1x16xf32>
    %cst_7 = arith.constant dense<0.000000e+00> : vector<1x256xf32>
    %7 = tpu.matmul %6, %1, %cst_7 {dimension_numbers = #tpu.dot_dimension_numbers<[1], [0], [0], [1], [0, 0, 1, 1], [], []>} : vector<1x16xf32>, vector<16x256xf32>, vector<1x256xf32> -> vector<1x256xf32>
    %cst_8 = arith.constant dense<0xFF800000> : vector<1x16xf32>
    %8 = vector.multi_reduction <maximumf>, %0, %cst_8 [2] : vector<1x16x256xf32> to vector<1x16xf32>
    %cst_9 = arith.constant dense<0xFF800000> : vector<1x256xf32>
    %9 = vector.multi_reduction <maximumf>, %0, %cst_9 [1] : vector<1x16x256xf32> to vector<1x256xf32>
    %10 = arith.addf %5, %8 : vector<1x16xf32>
    %c0_10 = arith.constant 0 : index
    %c0_11 = arith.constant 0 : index
    %11 = vector.load %arg4[%c0_10, %c0_11] : memref<16x4xf32, #tpu.memory_space<vmem>>, vector<16x4xf32>
    %cst_12 = arith.constant dense<0.000000e+00> : vector<1x4xf32>
    %12 = tpu.matmul %10, %11, %cst_12 {dimension_numbers = #tpu.dot_dimension_numbers<[1], [0], [0], [1], [0, 0, 1, 1], [], []>} : vector<1x16xf32>, vector<16x4xf32>, vector<1x4xf32> -> vector<1x4xf32>
    %cst_13 = arith.constant 0.000000e+00 : f32
    %13 = vector.broadcast %cst_13 : f32 to vector<1x4xf32>
    %14 = arith.maximumf %12, %13 : vector<1x4xf32>
    %c0_14 = arith.constant 0 : index
    %c0_15 = arith.constant 0 : index
    %15 = vector.load %arg5[%c0_14, %c0_15] : memref<4x16xf32, #tpu.memory_space<vmem>>, vector<4x16xf32>
    %cst_16 = arith.constant dense<0.000000e+00> : vector<1x16xf32>
    %16 = tpu.matmul %14, %15, %cst_16 {dimension_numbers = #tpu.dot_dimension_numbers<[1], [0], [0], [1], [0, 0, 1, 1], [], []>} : vector<1x4xf32>, vector<4x16xf32>, vector<1x16xf32> -> vector<1x16xf32>
    %17 = arith.negf %16 : vector<1x16xf32>
    %18 = math.exp %17 : vector<1x16xf32>
    %cst_17 = arith.constant 1.000000e+00 : f32
    %19 = vector.broadcast %cst_17 : f32 to vector<1x16xf32>
    %20 = arith.addf %19, %18 : vector<1x16xf32>
    %21 = arith.divf %19, %20 : vector<1x16xf32>
    %22 = vector.shape_cast %21 : vector<1x16xf32> to vector<1x16x1xf32>
    %23 = arith.addf %7, %9 : vector<1x256xf32>
    %c0_18 = arith.constant 0 : index
    %24 = memref.load %arg8[%c0_18] : memref<1xf32, #tpu.memory_space<smem>>
    %25 = vector.broadcast %24 : f32 to vector<1x256xf32>
    %c34_i32 = arith.constant 34 : i32
    %26 = tpu.dynamic_rotate %23 by %c34_i32 dim 1 : vector<1x256xf32>, i32 -> vector<1x256xf32>
    %c0_19 = arith.constant 0 : index
    %c0_20 = arith.constant 0 : index
    %27 = vector.load %arg6[%c0_19, %c0_20] : memref<25x256xf32, #tpu.memory_space<vmem>>, vector<1x256xf32>
    %28 = vector.shape_cast %27 : vector<1x256xf32> to vector<256xf32>
    %29 = vector.shape_cast %28 : vector<256xf32> to vector<1x256xf32>
    %30 = arith.mulf %29, %26 : vector<1x256xf32>
    %31 = arith.addf %25, %30 : vector<1x256xf32>
    %c33_i32 = arith.constant 33 : i32
    %32 = tpu.dynamic_rotate %23 by %c33_i32 dim 1 : vector<1x256xf32>, i32 -> vector<1x256xf32>
    %c1 = arith.constant 1 : index
    %c0_21 = arith.constant 0 : index
    %33 = vector.load %arg6[%c1, %c0_21] : memref<25x256xf32, #tpu.memory_space<vmem>>, vector<1x256xf32>
    %34 = vector.shape_cast %33 : vector<1x256xf32> to vector<256xf32>
    %35 = vector.shape_cast %34 : vector<256xf32> to vector<1x256xf32>
    %36 = arith.mulf %35, %32 : vector<1x256xf32>
    %37 = arith.addf %31, %36 : vector<1x256xf32>
    %c32_i32 = arith.constant 32 : i32
    %38 = tpu.dynamic_rotate %23 by %c32_i32 dim 1 : vector<1x256xf32>, i32 -> vector<1x256xf32>
    %c2 = arith.constant 2 : index
    %c0_22 = arith.constant 0 : index
    %39 = vector.load %arg6[%c2, %c0_22] : memref<25x256xf32, #tpu.memory_space<vmem>>, vector<1x256xf32>
    %40 = vector.shape_cast %39 : vector<1x256xf32> to vector<256xf32>
    %41 = vector.shape_cast %40 : vector<256xf32> to vector<1x256xf32>
    %42 = arith.mulf %41, %38 : vector<1x256xf32>
    %43 = arith.addf %37, %42 : vector<1x256xf32>
    %c31_i32 = arith.constant 31 : i32
    %44 = tpu.dynamic_rotate %23 by %c31_i32 dim 1 : vector<1x256xf32>, i32 -> vector<1x256xf32>
    %c3 = arith.constant 3 : index
    %c0_23 = arith.constant 0 : index
    %45 = vector.load %arg6[%c3, %c0_23] : memref<25x256xf32, #tpu.memory_space<vmem>>, vector<1x256xf32>
    %46 = vector.shape_cast %45 : vector<1x256xf32> to vector<256xf32>
    %47 = vector.shape_cast %46 : vector<256xf32> to vector<1x256xf32>
    %48 = arith.mulf %47, %44 : vector<1x256xf32>
    %49 = arith.addf %43, %48 : vector<1x256xf32>
    %c30_i32 = arith.constant 30 : i32
    %50 = tpu.dynamic_rotate %23 by %c30_i32 dim 1 : vector<1x256xf32>, i32 -> vector<1x256xf32>
    %c4 = arith.constant 4 : index
    %c0_24 = arith.constant 0 : index
    %51 = vector.load %arg6[%c4, %c0_24] : memref<25x256xf32, #tpu.memory_space<vmem>>, vector<1x256xf32>
    %52 = vector.shape_cast %51 : vector<1x256xf32> to vector<256xf32>
    %53 = vector.shape_cast %52 : vector<256xf32> to vector<1x256xf32>
    %54 = arith.mulf %53, %50 : vector<1x256xf32>
    %55 = arith.addf %49, %54 : vector<1x256xf32>
    %c18_i32 = arith.constant 18 : i32
    %56 = tpu.dynamic_rotate %23 by %c18_i32 dim 1 : vector<1x256xf32>, i32 -> vector<1x256xf32>
    %c5 = arith.constant 5 : index
    %c0_25 = arith.constant 0 : index
    %57 = vector.load %arg6[%c5, %c0_25] : memref<25x256xf32, #tpu.memory_space<vmem>>, vector<1x256xf32>
    %58 = vector.shape_cast %57 : vector<1x256xf32> to vector<256xf32>
    %59 = vector.shape_cast %58 : vector<256xf32> to vector<1x256xf32>
    %60 = arith.mulf %59, %56 : vector<1x256xf32>
    %61 = arith.addf %55, %60 : vector<1x256xf32>
    %c17_i32 = arith.constant 17 : i32
    %62 = tpu.dynamic_rotate %23 by %c17_i32 dim 1 : vector<1x256xf32>, i32 -> vector<1x256xf32>
    %c6 = arith.constant 6 : index
    %c0_26 = arith.constant 0 : index
    %63 = vector.load %arg6[%c6, %c0_26] : memref<25x256xf32, #tpu.memory_space<vmem>>, vector<1x256xf32>
    %64 = vector.shape_cast %63 : vector<1x256xf32> to vector<256xf32>
    %65 = vector.shape_cast %64 : vector<256xf32> to vector<1x256xf32>
    %66 = arith.mulf %65, %62 : vector<1x256xf32>
    %67 = arith.addf %61, %66 : vector<1x256xf32>
    %c16_i32 = arith.constant 16 : i32
    %68 = tpu.dynamic_rotate %23 by %c16_i32 dim 1 : vector<1x256xf32>, i32 -> vector<1x256xf32>
    %c7 = arith.constant 7 : index
    %c0_27 = arith.constant 0 : index
    %69 = vector.load %arg6[%c7, %c0_27] : memref<25x256xf32, #tpu.memory_space<vmem>>, vector<1x256xf32>
    %70 = vector.shape_cast %69 : vector<1x256xf32> to vector<256xf32>
    %71 = vector.shape_cast %70 : vector<256xf32> to vector<1x256xf32>
    %72 = arith.mulf %71, %68 : vector<1x256xf32>
    %73 = arith.addf %67, %72 : vector<1x256xf32>
    %c15_i32 = arith.constant 15 : i32
    %74 = tpu.dynamic_rotate %23 by %c15_i32 dim 1 : vector<1x256xf32>, i32 -> vector<1x256xf32>
    %c8 = arith.constant 8 : index
    %c0_28 = arith.constant 0 : index
    %75 = vector.load %arg6[%c8, %c0_28] : memref<25x256xf32, #tpu.memory_space<vmem>>, vector<1x256xf32>
    %76 = vector.shape_cast %75 : vector<1x256xf32> to vector<256xf32>
    %77 = vector.shape_cast %76 : vector<256xf32> to vector<1x256xf32>
    %78 = arith.mulf %77, %74 : vector<1x256xf32>
    %79 = arith.addf %73, %78 : vector<1x256xf32>
    %c14_i32 = arith.constant 14 : i32
    %80 = tpu.dynamic_rotate %23 by %c14_i32 dim 1 : vector<1x256xf32>, i32 -> vector<1x256xf32>
    %c9 = arith.constant 9 : index
    %c0_29 = arith.constant 0 : index
    %81 = vector.load %arg6[%c9, %c0_29] : memref<25x256xf32, #tpu.memory_space<vmem>>, vector<1x256xf32>
    %82 = vector.shape_cast %81 : vector<1x256xf32> to vector<256xf32>
    %83 = vector.shape_cast %82 : vector<256xf32> to vector<1x256xf32>
    %84 = arith.mulf %83, %80 : vector<1x256xf32>
    %85 = arith.addf %79, %84 : vector<1x256xf32>
    %c2_i32 = arith.constant 2 : i32
    %86 = tpu.dynamic_rotate %23 by %c2_i32 dim 1 : vector<1x256xf32>, i32 -> vector<1x256xf32>
    %c10 = arith.constant 10 : index
    %c0_30 = arith.constant 0 : index
    %87 = vector.load %arg6[%c10, %c0_30] : memref<25x256xf32, #tpu.memory_space<vmem>>, vector<1x256xf32>
    %88 = vector.shape_cast %87 : vector<1x256xf32> to vector<256xf32>
    %89 = vector.shape_cast %88 : vector<256xf32> to vector<1x256xf32>
    %90 = arith.mulf %89, %86 : vector<1x256xf32>
    %91 = arith.addf %85, %90 : vector<1x256xf32>
    %c1_i32 = arith.constant 1 : i32
    %92 = tpu.dynamic_rotate %23 by %c1_i32 dim 1 : vector<1x256xf32>, i32 -> vector<1x256xf32>
    %c11 = arith.constant 11 : index
    %c0_31 = arith.constant 0 : index
    %93 = vector.load %arg6[%c11, %c0_31] : memref<25x256xf32, #tpu.memory_space<vmem>>, vector<1x256xf32>
    %94 = vector.shape_cast %93 : vector<1x256xf32> to vector<256xf32>
    %95 = vector.shape_cast %94 : vector<256xf32> to vector<1x256xf32>
    %96 = arith.mulf %95, %92 : vector<1x256xf32>
    %97 = arith.addf %91, %96 : vector<1x256xf32>
    %c0_i32 = arith.constant 0 : i32
    %98 = tpu.dynamic_rotate %23 by %c0_i32 dim 1 : vector<1x256xf32>, i32 -> vector<1x256xf32>
    %c12 = arith.constant 12 : index
    %c0_32 = arith.constant 0 : index
    %99 = vector.load %arg6[%c12, %c0_32] : memref<25x256xf32, #tpu.memory_space<vmem>>, vector<1x256xf32>
    %100 = vector.shape_cast %99 : vector<1x256xf32> to vector<256xf32>
    %101 = vector.shape_cast %100 : vector<256xf32> to vector<1x256xf32>
    %102 = arith.mulf %101, %98 : vector<1x256xf32>
    %103 = arith.addf %97, %102 : vector<1x256xf32>
    %c255_i32 = arith.constant 255 : i32
    %104 = tpu.dynamic_rotate %23 by %c255_i32 dim 1 : vector<1x256xf32>, i32 -> vector<1x256xf32>
    %c13 = arith.constant 13 : index
    %c0_33 = arith.constant 0 : index
    %105 = vector.load %arg6[%c13, %c0_33] : memref<25x256xf32, #tpu.memory_space<vmem>>, vector<1x256xf32>
    %106 = vector.shape_cast %105 : vector<1x256xf32> to vector<256xf32>
    %107 = vector.shape_cast %106 : vector<256xf32> to vector<1x256xf32>
    %108 = arith.mulf %107, %104 : vector<1x256xf32>
    %109 = arith.addf %103, %108 : vector<1x256xf32>
    %c254_i32 = arith.constant 254 : i32
    %110 = tpu.dynamic_rotate %23 by %c254_i32 dim 1 : vector<1x256xf32>, i32 -> vector<1x256xf32>
    %c14 = arith.constant 14 : index
    %c0_34 = arith.constant 0 : index
    %111 = vector.load %arg6[%c14, %c0_34] : memref<25x256xf32, #tpu.memory_space<vmem>>, vector<1x256xf32>
    %112 = vector.shape_cast %111 : vector<1x256xf32> to vector<256xf32>
    %113 = vector.shape_cast %112 : vector<256xf32> to vector<1x256xf32>
    %114 = arith.mulf %113, %110 : vector<1x256xf32>
    %115 = arith.addf %109, %114 : vector<1x256xf32>
    %c242_i32 = arith.constant 242 : i32
    %116 = tpu.dynamic_rotate %23 by %c242_i32 dim 1 : vector<1x256xf32>, i32 -> vector<1x256xf32>
    %c15 = arith.constant 15 : index
    %c0_35 = arith.constant 0 : index
    %117 = vector.load %arg6[%c15, %c0_35] : memref<25x256xf32, #tpu.memory_space<vmem>>, vector<1x256xf32>
    %118 = vector.shape_cast %117 : vector<1x256xf32> to vector<256xf32>
    %119 = vector.shape_cast %118 : vector<256xf32> to vector<1x256xf32>
    %120 = arith.mulf %119, %116 : vector<1x256xf32>
    %121 = arith.addf %115, %120 : vector<1x256xf32>
    %c241_i32 = arith.constant 241 : i32
    %122 = tpu.dynamic_rotate %23 by %c241_i32 dim 1 : vector<1x256xf32>, i32 -> vector<1x256xf32>
    %c16 = arith.constant 16 : index
    %c0_36 = arith.constant 0 : index
    %123 = vector.load %arg6[%c16, %c0_36] : memref<25x256xf32, #tpu.memory_space<vmem>>, vector<1x256xf32>
    %124 = vector.shape_cast %123 : vector<1x256xf32> to vector<256xf32>
    %125 = vector.shape_cast %124 : vector<256xf32> to vector<1x256xf32>
    %126 = arith.mulf %125, %122 : vector<1x256xf32>
    %127 = arith.addf %121, %126 : vector<1x256xf32>
    %c240_i32 = arith.constant 240 : i32
    %128 = tpu.dynamic_rotate %23 by %c240_i32 dim 1 : vector<1x256xf32>, i32 -> vector<1x256xf32>
    %c17 = arith.constant 17 : index
    %c0_37 = arith.constant 0 : index
    %129 = vector.load %arg6[%c17, %c0_37] : memref<25x256xf32, #tpu.memory_space<vmem>>, vector<1x256xf32>
    %130 = vector.shape_cast %129 : vector<1x256xf32> to vector<256xf32>
    %131 = vector.shape_cast %130 : vector<256xf32> to vector<1x256xf32>
    %132 = arith.mulf %131, %128 : vector<1x256xf32>
    %133 = arith.addf %127, %132 : vector<1x256xf32>
    %c239_i32 = arith.constant 239 : i32
    %134 = tpu.dynamic_rotate %23 by %c239_i32 dim 1 : vector<1x256xf32>, i32 -> vector<1x256xf32>
    %c18 = arith.constant 18 : index
    %c0_38 = arith.constant 0 : index
    %135 = vector.load %arg6[%c18, %c0_38] : memref<25x256xf32, #tpu.memory_space<vmem>>, vector<1x256xf32>
    %136 = vector.shape_cast %135 : vector<1x256xf32> to vector<256xf32>
    %137 = vector.shape_cast %136 : vector<256xf32> to vector<1x256xf32>
    %138 = arith.mulf %137, %134 : vector<1x256xf32>
    %139 = arith.addf %133, %138 : vector<1x256xf32>
    %c238_i32 = arith.constant 238 : i32
    %140 = tpu.dynamic_rotate %23 by %c238_i32 dim 1 : vector<1x256xf32>, i32 -> vector<1x256xf32>
    %c19 = arith.constant 19 : index
    %c0_39 = arith.constant 0 : index
    %141 = vector.load %arg6[%c19, %c0_39] : memref<25x256xf32, #tpu.memory_space<vmem>>, vector<1x256xf32>
    %142 = vector.shape_cast %141 : vector<1x256xf32> to vector<256xf32>
    %143 = vector.shape_cast %142 : vector<256xf32> to vector<1x256xf32>
    %144 = arith.mulf %143, %140 : vector<1x256xf32>
    %145 = arith.addf %139, %144 : vector<1x256xf32>
    %c226_i32 = arith.constant 226 : i32
    %146 = tpu.dynamic_rotate %23 by %c226_i32 dim 1 : vector<1x256xf32>, i32 -> vector<1x256xf32>
    %c20 = arith.constant 20 : index
    %c0_40 = arith.constant 0 : index
    %147 = vector.load %arg6[%c20, %c0_40] : memref<25x256xf32, #tpu.memory_space<vmem>>, vector<1x256xf32>
    %148 = vector.shape_cast %147 : vector<1x256xf32> to vector<256xf32>
    %149 = vector.shape_cast %148 : vector<256xf32> to vector<1x256xf32>
    %150 = arith.mulf %149, %146 : vector<1x256xf32>
    %151 = arith.addf %145, %150 : vector<1x256xf32>
    %c225_i32 = arith.constant 225 : i32
    %152 = tpu.dynamic_rotate %23 by %c225_i32 dim 1 : vector<1x256xf32>, i32 -> vector<1x256xf32>
    %c21 = arith.constant 21 : index
    %c0_41 = arith.constant 0 : index
    %153 = vector.load %arg6[%c21, %c0_41] : memref<25x256xf32, #tpu.memory_space<vmem>>, vector<1x256xf32>
    %154 = vector.shape_cast %153 : vector<1x256xf32> to vector<256xf32>
    %155 = vector.shape_cast %154 : vector<256xf32> to vector<1x256xf32>
    %156 = arith.mulf %155, %152 : vector<1x256xf32>
    %157 = arith.addf %151, %156 : vector<1x256xf32>
    %c224_i32 = arith.constant 224 : i32
    %158 = tpu.dynamic_rotate %23 by %c224_i32 dim 1 : vector<1x256xf32>, i32 -> vector<1x256xf32>
    %c22 = arith.constant 22 : index
    %c0_42 = arith.constant 0 : index
    %159 = vector.load %arg6[%c22, %c0_42] : memref<25x256xf32, #tpu.memory_space<vmem>>, vector<1x256xf32>
    %160 = vector.shape_cast %159 : vector<1x256xf32> to vector<256xf32>
    %161 = vector.shape_cast %160 : vector<256xf32> to vector<1x256xf32>
    %162 = arith.mulf %161, %158 : vector<1x256xf32>
    %163 = arith.addf %157, %162 : vector<1x256xf32>
    %c223_i32 = arith.constant 223 : i32
    %164 = tpu.dynamic_rotate %23 by %c223_i32 dim 1 : vector<1x256xf32>, i32 -> vector<1x256xf32>
    %c23 = arith.constant 23 : index
    %c0_43 = arith.constant 0 : index
    %165 = vector.load %arg6[%c23, %c0_43] : memref<25x256xf32, #tpu.memory_space<vmem>>, vector<1x256xf32>
    %166 = vector.shape_cast %165 : vector<1x256xf32> to vector<256xf32>
    %167 = vector.shape_cast %166 : vector<256xf32> to vector<1x256xf32>
    %168 = arith.mulf %167, %164 : vector<1x256xf32>
    %169 = arith.addf %163, %168 : vector<1x256xf32>
    %c222_i32 = arith.constant 222 : i32
    %170 = tpu.dynamic_rotate %23 by %c222_i32 dim 1 : vector<1x256xf32>, i32 -> vector<1x256xf32>
    %c24 = arith.constant 24 : index
    %c0_44 = arith.constant 0 : index
    %171 = vector.load %arg6[%c24, %c0_44] : memref<25x256xf32, #tpu.memory_space<vmem>>, vector<1x256xf32>
    %172 = vector.shape_cast %171 : vector<1x256xf32> to vector<256xf32>
    %173 = vector.shape_cast %172 : vector<256xf32> to vector<1x256xf32>
    %174 = arith.mulf %173, %170 : vector<1x256xf32>
    %175 = arith.addf %169, %174 : vector<1x256xf32>
    %176 = arith.negf %175 : vector<1x256xf32>
    %177 = math.exp %176 : vector<1x256xf32>
    %cst_45 = arith.constant 1.000000e+00 : f32
    %178 = vector.broadcast %cst_45 : f32 to vector<1x256xf32>
    %179 = arith.addf %178, %177 : vector<1x256xf32>
    %180 = arith.divf %178, %179 : vector<1x256xf32>
    %181 = vector.shape_cast %180 : vector<1x256xf32> to vector<1x1x256xf32>
    %cst_46 = arith.constant 1.000000e+00 : f32
    %182 = vector.broadcast %cst_46 : f32 to vector<1x16x1xf32>
    %183 = arith.addf %22, %182 : vector<1x16x1xf32>
    %184 = vector.broadcast %183 : vector<1x16x1xf32> to vector<1x16x256xf32>
    %185 = vector.broadcast %181 : vector<1x1x256xf32> to vector<1x16x256xf32>
    %186 = arith.addf %184, %185 : vector<1x16x256xf32>
    %187 = arith.mulf %0, %186 : vector<1x16x256xf32>
    %c0_47 = arith.constant 0 : index
    %c0_48 = arith.constant 0 : index
    %c0_49 = arith.constant 0 : index
    %188 = vector.load %arg9[%c0_47, %c0_48, %c0_49] : memref<1x16x256xf32, #tpu.memory_space<vmem>>, vector<1x16x256xf32>
    tpu.vector_store %arg9[%c0_47, %c0_48, %c0_49], %187 {strides = array<i32>} : memref<1x16x256xf32, #tpu.memory_space<vmem>>, vector<1x16x256xf32>,
    return
  }
  func.func @transform_0(%arg0: i32) -> (i32, i32, i32) {
    %c0_i32 = arith.constant 0 : i32
    %c0_i32_0 = arith.constant 0 : i32
    %c0_i32_1 = arith.constant 0 : i32
    return %arg0, %c0_i32, %c0_i32_0 : i32, i32, i32
  }
  func.func @transform_1(%arg0: i32) -> (i32, i32) {
    %c0_i32 = arith.constant 0 : i32
    %c0_i32_0 = arith.constant 0 : i32
    %c0_i32_1 = arith.constant 0 : i32
    return %c0_i32, %c0_i32_0 : i32, i32
  }
  func.func @transform_2(%arg0: i32) -> (i32, i32) {
    %c0_i32 = arith.constant 0 : i32
    %c0_i32_0 = arith.constant 0 : i32
    %c0_i32_1 = arith.constant 0 : i32
    return %c0_i32, %c0_i32_0 : i32, i32
  }
  func.func @transform_3(%arg0: i32) -> (i32, i32) {
    %c0_i32 = arith.constant 0 : i32
    %c0_i32_0 = arith.constant 0 : i32
    %c0_i32_1 = arith.constant 0 : i32
    return %c0_i32, %c0_i32_0 : i32, i32
  }
  func.func @transform_4(%arg0: i32) -> (i32, i32) {
    %c0_i32 = arith.constant 0 : i32
    %c0_i32_0 = arith.constant 0 : i32
    %c0_i32_1 = arith.constant 0 : i32
    return %c0_i32, %c0_i32_0 : i32, i32
  }
  func.func @transform_5(%arg0: i32) -> (i32, i32) {
    %c0_i32 = arith.constant 0 : i32
    %c0_i32_0 = arith.constant 0 : i32
    %c0_i32_1 = arith.constant 0 : i32
    return %c0_i32, %c0_i32_0 : i32, i32
  }
  func.func @transform_6(%arg0: i32) -> (i32, i32) {
    %c0_i32 = arith.constant 0 : i32
    %c0_i32_0 = arith.constant 0 : i32
    %c0_i32_1 = arith.constant 0 : i32
    return %c0_i32, %c0_i32_0 : i32, i32
  }
  func.func @transform_7(%arg0: i32) -> i32 {
    %c0_i32 = arith.constant 0 : i32
    %c0_i32_0 = arith.constant 0 : i32
    return %c0_i32 : i32
  }
  func.func @transform_8(%arg0: i32) -> (i32, i32, i32) {
    %c0_i32 = arith.constant 0 : i32
    %c0_i32_0 = arith.constant 0 : i32
    %c0_i32_1 = arith.constant 0 : i32
    return %arg0, %c0_i32, %c0_i32_0 : i32, i32, i32
  }
}

</mosaic_0001>

<llo_original>
// kernel: tpu_custom_call.1
$region0: #{tpu_custom_call.1}
  #allocation0 [shape = 'u32[]', space=smem, size = 0x4, offset = 0x4, fixed_abs, tag = 'smem constant byte address 0x4 - core index']
  #allocation1 [shape = 'u32[72,128]{1,0:T(1,128)}', space=vmem, size = 0x9000, scoped, tag = 'internal scratch']
  #allocation2 [shape = 'f32[1]{0:T(128)S(6)}', space=smem, size = 0x200, scoped, tag = 'scoped memory for tpu_custom_call.1']
  %s0 = inlined_call_operand.vmem [shape: f32[2,16,256], index: 0, kind: input, shape index: {}]
  %s1 = inlined_call_operand.vmem [shape: f32[256,8], index: 1, kind: input, shape index: {}]
  %s2 = inlined_call_operand.vmem [shape: f32[1,16], index: 2, kind: input, shape index: {}]
  %s3 = inlined_call_operand.vmem [shape: f32[16,4], index: 3, kind: input, shape index: {}]
  %s4 = inlined_call_operand.vmem [shape: f32[4,16], index: 4, kind: input, shape index: {}]
  %s5 = inlined_call_operand.vmem [shape: f32[25,256], index: 5, kind: input, shape index: {}]
  %s6 = inlined_call_operand.vmem [shape: f32[1,256], index: 6, kind: input, shape index: {}]
  %s7 = inlined_call_operand.<no memory space> [shape: f32[1], index: 7, kind: input, shape index: {}]
  %s8 = inlined_call_operand.hbm [shape: f32[2,16,256], index: 8, kind: output, shape index: {}]
  %s9 = sld [smem:[#allocation0]]
  $region65: #{tpu_custom_call.1} parent=0
    _
  %s11 = ssub.s32 1, %s9
  %s12 = scalar_select 0, %s11, %s9
  %13 = sst [smem:[#allocation2]] %s7
  $region1: #{tpu_custom_call.1} parent=0
    #allocation3 [shape = 'u8[32768]{0}', space=vmem, size = 0x8000, scoped, tag = 'output window, operand 0']
    #allocation4 [shape = 's32[2]{0}', space=sflag, size = 0x8, scoped, tag = 'scoped memory for tpu_custom_call.1']
    %14 = vsyncpa [#allocation4], 0
    %s15 = scalar_lea.sflag [#allocation4], 1
    %16 = vsyncpa %s15, 0
    loop: start=0, step=1, limit=4
    $region2: #{tpu_custom_call.1} parent=1 // loop_pre_header
      _
    $region3: #{tpu_custom_call.1} parent=1 // loop_header
      %s18 = sphi 0, %s22
      %p19 = scmp.ge.s32.totalorder %s18, 4
      %s28 = sphi 0, %s30
      %s31 = sphi 0, %s28
      %s32 = sphi 0, %s31
      %s48 = sphi 0, %s32
      %s52 = sphi 0, %s52
      %s54 = sphi 0, %s52
      %s55 = sphi 0, %s54
      %s69 = sphi 0, %s55
      %s73 = sphi 0, %s73
      %s75 = sphi 0, %s73
      %s76 = sphi 0, %s75
      %s90 = sphi 0, %s76
      %s94 = sphi 0, %s94
      %s96 = sphi 0, %s94
      %s97 = sphi 0, %s96
      %s111 = sphi 0, %s97
      %s115 = sphi 0, %s115
      %s117 = sphi 0, %s115
      %s118 = sphi 0, %s117
      %s132 = sphi 0, %s118
      %s136 = sphi 0, %s136
      %s138 = sphi 0, %s136
      %s139 = sphi 0, %s138
      %s153 = sphi 0, %s139
      %s157 = sphi 0, %s157
      %s159 = sphi 0, %s157
      %s160 = sphi 0, %s159
      %s174 = sphi 0, %s160
      %s178 = sphi 0, %s178
      %s180 = sphi 0, %s178
      %s181 = sphi 0, %s180
      %s195 = sphi 0, %s181
      %s201 = sphi 0, %s203
      %s204 = sphi 0, %s201
      %s205 = sphi 0, %s204
      %s221 = sphi 0, %s205
    $region4: #{tpu_custom_call.1} parent=1 // loop_header_branch
      %21 = sbr.rel (%p19) target = $region8
    $region5: #{tpu_custom_call.1} parent=1 // loop_body
      %s23 = ssub.s32 %s18, 1
      %s24 = ssub.s32 %s18, 2
      %s25 = sadd.s32 %s18, 1
      %s26 = ssub.s32 %s18, %s25
      %p27 = scmp.eq.s32.totalorder %s26, 0
      %s29 = sadd.s32 %s28, 1
      %s30 = scalar_select %p27, %s28, %s29
      %p33 = pneg %p27
      %p34 = scmp.eq.s32.totalorder %s18, 1
      %p35 = por %p33, %p34
      %p36 = scmp.ne.s32.totalorder %s28, %s31
      %p37 = scmp.eq.s32.totalorder %s18, 0
      %p38 = por %p36, %p37
      %p39 = scmp.ne.s32.totalorder %s28, %s31
      %p40 = scmp.eq.s32.totalorder %s23, 1
      %p41 = por %p39, %p40
      %p42 = scmp.ne.s32.totalorder %s31, %s32
      %p43 = scmp.eq.s32.totalorder %s23, 0
      %p44 = por %p42, %p43
      %p45 = scmp.ne.s32.totalorder %s31, %s32
      %p46 = scmp.eq.s32.totalorder %s24, 1
      %p47 = por %p45, %p46
      %p49 = scmp.ne.s32.totalorder %s32, %s48
      %p50 = scmp.eq.s32.totalorder %s24, 0
      %p51 = por %p49, %p50
      %s53 = sadd.s32 %s52, 1
      %p56 = scmp.eq.s32.totalorder %s18, 1
      %p57 = scmp.ne.s32.totalorder %s52, %s54
      %p58 = scmp.eq.s32.totalorder %s18, 0
      %p59 = por %p57, %p58
      %p60 = scmp.ne.s32.totalorder %s52, %s54
      %p61 = scmp.eq.s32.totalorder %s23, 1
      %p62 = por %p60, %p61
      %p63 = scmp.ne.s32.totalorder %s54, %s55
      %p64 = scmp.eq.s32.totalorder %s23, 0
      %p65 = por %p63, %p64
      %p66 = scmp.ne.s32.totalorder %s54, %s55
      %p67 = scmp.eq.s32.totalorder %s24, 1
      %p68 = por %p66, %p67
      %p70 = scmp.ne.s32.totalorder %s55, %s69
      %p71 = scmp.eq.s32.totalorder %s24, 0
      %p72 = por %p70, %p71
      %s74 = sadd.s32 %s73, 1
      %p77 = scmp.eq.s32.totalorder %s18, 1
      %p78 = scmp.ne.s32.totalorder %s73, %s75
      %p79 = scmp.eq.s32.totalorder %s18, 0
      %p80 = por %p78, %p79
      %p81 = scmp.ne.s32.totalorder %s73, %s75
      %p82 = scmp.eq.s32.totalorder %s23, 1
      %p83 = por %p81, %p82
      %p84 = scmp.ne.s32.totalorder %s75, %s76
      %p85 = scmp.eq.s32.totalorder %s23, 0
      %p86 = por %p84, %p85
      %p87 = scmp.ne.s32.totalorder %s75, %s76
      %p88 = scmp.eq.s32.totalorder %s24, 1
      %p89 = por %p87, %p88
      %p91 = scmp.ne.s32.totalorder %s76, %s90
      %p92 = scmp.eq.s32.totalorder %s24, 0
      %p93 = por %p91, %p92
      %s95 = sadd.s32 %s94, 1
      %p98 = scmp.eq.s32.totalorder %s18, 1
      %p99 = scmp.ne.s32.totalorder %s94, %s96
      %p100 = scmp.eq.s32.totalorder %s18, 0
      %p101 = por %p99, %p100
      %p102 = scmp.ne.s32.totalorder %s94, %s96
      %p103 = scmp.eq.s32.totalorder %s23, 1
      %p104 = por %p102, %p103
      %p105 = scmp.ne.s32.totalorder %s96, %s97
      %p106 = scmp.eq.s32.totalorder %s23, 0
      %p107 = por %p105, %p106
      %p108 = scmp.ne.s32.totalorder %s96, %s97
      %p109 = scmp.eq.s32.totalorder %s24, 1
      %p110 = por %p108, %p109
      %p112 = scmp.ne.s32.totalorder %s97, %s111
      %p113 = scmp.eq.s32.totalorder %s24, 0
      %p114 = por %p112, %p113
      %s116 = sadd.s32 %s115, 1
      %p119 = scmp.eq.s32.totalorder %s18, 1
      %p120 = scmp.ne.s32.totalorder %s115, %s117
      %p121 = scmp.eq.s32.totalorder %s18, 0
      %p122 = por %p120, %p121
      %p123 = scmp.ne.s32.totalorder %s115, %s117
      %p124 = scmp.eq.s32.totalorder %s23, 1
      %p125 = por %p123, %p124
      %p126 = scmp.ne.s32.totalorder %s117, %s118
      %p127 = scmp.eq.s32.totalorder %s23, 0
      %p128 = por %p126, %p127
      %p129 = scmp.ne.s32.totalorder %s117, %s118
      %p130 = scmp.eq.s32.totalorder %s24, 1
      %p131 = por %p129, %p130
      %p133 = scmp.ne.s32.totalorder %s118, %s132
      %p134 = scmp.eq.s32.totalorder %s24, 0
      %p135 = por %p133, %p134
      %s137 = sadd.s32 %s136, 1
      %p140 = scmp.eq.s32.totalorder %s18, 1
      %p141 = scmp.ne.s32.totalorder %s136, %s138
      %p142 = scmp.eq.s32.totalorder %s18, 0
      %p143 = por %p141, %p142
      %p144 = scmp.ne.s32.totalorder %s136, %s138
      %p145 = scmp.eq.s32.totalorder %s23, 1
      %p146 = por %p144, %p145
      %p147 = scmp.ne.s32.totalorder %s138, %s139
      %p148 = scmp.eq.s32.totalorder %s23, 0
      %p149 = por %p147, %p148
      %p150 = scmp.ne.s32.totalorder %s138, %s139
      %p151 = scmp.eq.s32.totalorder %s24, 1
      %p152 = por %p150, %p151
      %p154 = scmp.ne.s32.totalorder %s139, %s153
      %p155 = scmp.eq.s32.totalorder %s24, 0
      %p156 = por %p154, %p155
      %s158 = sadd.s32 %s157, 1
      %p161 = scmp.eq.s32.totalorder %s18, 1
      %p162 = scmp.ne.s32.totalorder %s157, %s159
      %p163 = scmp.eq.s32.totalorder %s18, 0
      %p164 = por %p162, %p163
      %p165 = scmp.ne.s32.totalorder %s157, %s159
      %p166 = scmp.eq.s32.totalorder %s23, 1
      %p167 = por %p165, %p166
      %p168 = scmp.ne.s32.totalorder %s159, %s160
      %p169 = scmp.eq.s32.totalorder %s23, 0
      %p170 = por %p168, %p169
      %p171 = scmp.ne.s32.totalorder %s159, %s160
      %p172 = scmp.eq.s32.totalorder %s24, 1
      %p173 = por %p171, %p172
      %p175 = scmp.ne.s32.totalorder %s160, %s174
      %p176 = scmp.eq.s32.totalorder %s24, 0
      %p177 = por %p175, %p176
      %s179 = sadd.s32 %s178, 1
      %p182 = scmp.eq.s32.totalorder %s18, 1
      %p183 = scmp.ne.s32.totalorder %s178, %s180
      %p184 = scmp.eq.s32.totalorder %s18, 0
      %p185 = por %p183, %p184
      %p186 = scmp.ne.s32.totalorder %s178, %s180
      %p187 = scmp.eq.s32.totalorder %s23, 1
      %p188 = por %p186, %p187
      %p189 = scmp.ne.s32.totalorder %s180, %s181
      %p190 = scmp.eq.s32.totalorder %s23, 0
      %p191 = por %p189, %p190
      %p192 = scmp.ne.s32.totalorder %s180, %s181
      %p193 = scmp.eq.s32.totalorder %s24, 1
      %p194 = por %p192, %p193
      %p196 = scmp.ne.s32.totalorder %s181, %s195
      %p197 = scmp.eq.s32.totalorder %s24, 0
      %p198 = por %p196, %p197
      %s199 = ssub.s32 %s18, %s25
      %p200 = scmp.eq.s32.totalorder %s199, 0
      %s202 = sadd.s32 %s201, 1
      %s203 = scalar_select %p200, %s201, %s202
      %p206 = pneg %p200
      %p207 = scmp.eq.s32.totalorder %s18, 1
      %p208 = por %p206, %p207
      %p209 = scmp.ne.s32.totalorder %s201, %s204
      %p210 = scmp.eq.s32.totalorder %s18, 0
      %p211 = por %p209, %p210
      %p212 = scmp.ne.s32.totalorder %s201, %s204
      %p213 = scmp.eq.s32.totalorder %s23, 1
      %p214 = por %p212, %p213
      %p215 = scmp.ne.s32.totalorder %s204, %s205
      %p216 = scmp.eq.s32.totalorder %s23, 0
      %p217 = por %p215, %p216
      %p218 = scmp.ne.s32.totalorder %s204, %s205
      %p219 = scmp.eq.s32.totalorder %s24, 1
      %p220 = por %p218, %p219
      %p222 = scmp.ne.s32.totalorder %s205, %s221
      %p223 = scmp.eq.s32.totalorder %s24, 0
      %p224 = por %p222, %p223
      %p225 = scmp.le.s32.totalorder 1, %s18
      %p226 = scmp.lt.s32.totalorder %s18, 3
      %p227 = pnand %p225, %p226
      %p228 = pneg %p227
      // Predicated region
      $region9: #{tpu_custom_call.1} parent=5 // pred_check
        _
      $region10: #{tpu_custom_call.1} parent=5 // pred_check_branch
        %230 = sbr.rel (%p227) target = $region12
      $region11: #{tpu_custom_call.1} parent=5 // pred_region
        %s231 = ssub.s32 %s18, 1
        // Predicated region
        $region13: #{tpu_custom_call.1} parent=11 // pred_check
          %p232 = pneg %p65
        $region14: #{tpu_custom_call.1} parent=11 // pred_check_branch
          %234 = sbr.rel (%p232) target = $region16
        $region15: #{tpu_custom_call.1} parent=11 // pred_region
          _
        $region16: #{tpu_custom_call.1} parent=11 // pred_fallthru
          _
        // Predicated region
        $region17: #{tpu_custom_call.1} parent=11 // pred_check
          %p235 = pneg %p86
        $region18: #{tpu_custom_call.1} parent=11 // pred_check_branch
          %237 = sbr.rel (%p235) target = $region20
        $region19: #{tpu_custom_call.1} parent=11 // pred_region
          _
        $region20: #{tpu_custom_call.1} parent=11 // pred_fallthru
          _
        // Predicated region
        $region21: #{tpu_custom_call.1} parent=11 // pred_check
          %p238 = pneg %p107
        $region22: #{tpu_custom_call.1} parent=11 // pred_check_branch
          %240 = sbr.rel (%p238) target = $region24
        $region23: #{tpu_custom_call.1} parent=11 // pred_region
          _
        $region24: #{tpu_custom_call.1} parent=11 // pred_fallthru
          _
        // Predicated region
        $region25: #{tpu_custom_call.1} parent=11 // pred_check
          %p241 = pneg %p128
        $region26: #{tpu_custom_call.1} parent=11 // pred_check_branch
          %243 = sbr.rel (%p241) target = $region28
        $region27: #{tpu_custom_call.1} parent=11 // pred_region
          _
        $region28: #{tpu_custom_call.1} parent=11 // pred_fallthru
          _
        // Predicated region
        $region29: #{tpu_custom_call.1} parent=11 // pred_check
          %p244 = pneg %p149
        $region30: #{tpu_custom_call.1} parent=11 // pred_check_branch
          %246 = sbr.rel (%p244) target = $region32
        $region31: #{tpu_custom_call.1} parent=11 // pred_region
          _
        $region32: #{tpu_custom_call.1} parent=11 // pred_fallthru
          _
        // Predicated region
        $region33: #{tpu_custom_call.1} parent=11 // pred_check
          %p247 = pneg %p170
        $region34: #{tpu_custom_call.1} parent=11 // pred_check_branch
          %249 = sbr.rel (%p247) target = $region36
        $region35: #{tpu_custom_call.1} parent=11 // pred_region
          _
        $region36: #{tpu_custom_call.1} parent=11 // pred_fallthru
          _
        // Predicated region
        $region37: #{tpu_custom_call.1} parent=11 // pred_check
          %p250 = pneg %p191
        $region38: #{tpu_custom_call.1} parent=11 // pred_check_branch
          %252 = sbr.rel (%p250) target = $region40
        $region39: #{tpu_custom_call.1} parent=11 // pred_region
          _
        $region40: #{tpu_custom_call.1} parent=11 // pred_fallthru
          _
      $region12: #{tpu_custom_call.1} parent=5 // pred_fallthru
        _
      %p253 = scmp.lt.s32.totalorder %s18, 2
      // Predicated region
      $region41: #{tpu_custom_call.1} parent=5 // pred_check
        %p254 = pneg %p253
      $region42: #{tpu_custom_call.1} parent=5 // pred_check_branch
        %256 = sbr.rel (%p254) target = $region44
      $region43: #{tpu_custom_call.1} parent=5 // pred_region
        // Predicated region
        $region45: #{tpu_custom_call.1} parent=43 // pred_check
          %p257 = pneg %p38
        $region46: #{tpu_custom_call.1} parent=43 // pred_check_branch
          %259 = sbr.rel (%p257) target = $region48
        $region47: #{tpu_custom_call.1} parent=43 // pred_region
          %p260 = scmp.lt.s32.totalorder %s18, 1
          %s261 = scalar_select %p260, %s18, 1
          %s262 = smul.addr %s261, 4
          %s263 = smul.addr %s262, 8
          %s264 = scalar_lea.vmem %s0, %s263
        $region48: #{tpu_custom_call.1} parent=43 // pred_fallthru
          _
      $region44: #{tpu_custom_call.1} parent=5 // pred_fallthru
        _
      %p265 = scmp.le.s32.totalorder 1, %s18
      %p266 = scmp.lt.s32.totalorder %s18, 3
      %p267 = pnand %p265, %p266
      %p268 = pneg %p267
      // Predicated region
      $region49: #{tpu_custom_call.1} parent=5 // pred_check
        _
      $region50: #{tpu_custom_call.1} parent=5 // pred_check_branch
        %270 = sbr.rel (%p267) target = $region52
      $region51: #{tpu_custom_call.1} parent=5 // pred_region
        %s271 = ssub.s32 %s18, 1
        %p272 = scmp.lt.s32.totalorder %s23, 1
        %s273 = scalar_select %p272, %s23, 1
        %s274 = smul.addr %s273, 4
        %s275 = smul.addr %s274, 8
        %s276 = scalar_lea.vmem %s0, %s275
        %p277 = pneg %p44
        %p278 = pneg %p41
        %p279 = pneg %p65
        %p280 = pneg %p62
        %p281 = pneg %p86
        %p282 = pneg %p83
        %p283 = pneg %p107
        %p284 = pneg %p104
        %p285 = pneg %p128
        %p286 = pneg %p125
        %p287 = pneg %p149
        %p288 = pneg %p146
        %p289 = pneg %p170
        %p290 = pneg %p167
        %p291 = pneg %p191
        %p292 = pneg %p188
        %p293 = pneg %p217
        %p294 = pneg %p214
        %s295 = sand.u32 %s204, 1
        %s296 = scalar_lea.sflag [#allocation4], %s295
        %s297 = sand.u32 %s204, 1
        %s298 = smul.addr %s297, 32
        %s299 = scalar_lea.vmem [#allocation3], %s298
        %p300 = scmp.lt.s32.totalorder %s23, 1
        %s301 = scalar_select %p300, %s23, 1
        %s302 = smul.addr %s301, 4
        %s303 = smul.addr %s302, 8
        %s304 = scalar_lea.vmem %s0, %s303
        %v305 = vld [vmem:[%s304] sm:$0xff]
        %v306 = vld [vmem:[%s304 + $0x8] sm:$0xff]
        %v307 = vld [vmem:[%s304 + $0x10] sm:$0xff]
        %v308 = vld [vmem:[%s304 + $0x18] sm:$0xff]
        %v309 = vld [vmem:[%s1] sm:$0xff]
        %v310 = vld [vmem:[%s1 + $0x8] sm:$0xff]
        %v311 = vld [vmem:[%s1 + $0x10] sm:$0xff]
        %v312 = vld [vmem:[%s1 + $0x18] sm:$0xff]
        %v313 = vld [vmem:[%s1 + $0x20] sm:$0xff]
        %v314 = vld [vmem:[%s1 + $0x28] sm:$0xff]
        %v315 = vld [vmem:[%s1 + $0x30] sm:$0xff]
        %v316 = vld [vmem:[%s1 + $0x38] sm:$0xff]
        %v317 = vld [vmem:[%s1 + $0x40] sm:$0xff]
        %v318 = vld [vmem:[%s1 + $0x48] sm:$0xff]
        %v319 = vld [vmem:[%s1 + $0x50] sm:$0xff]
        %v320 = vld [vmem:[%s1 + $0x58] sm:$0xff]
        %v321 = vld [vmem:[%s1 + $0x60] sm:$0xff]
        %v322 = vld [vmem:[%s1 + $0x68] sm:$0xff]
        %v323 = vld [vmem:[%s1 + $0x70] sm:$0xff]
        %v324 = vld [vmem:[%s1 + $0x78] sm:$0xff]
        %v325 = vld [vmem:[%s1 + $0x80] sm:$0xff]
        %v326 = vld [vmem:[%s1 + $0x88] sm:$0xff]
        %v327 = vld [vmem:[%s1 + $0x90] sm:$0xff]
        %v328 = vld [vmem:[%s1 + $0x98] sm:$0xff]
        %v329 = vld [vmem:[%s1 + $0xa0] sm:$0xff]
        %v330 = vld [vmem:[%s1 + $0xa8] sm:$0xff]
        %v331 = vld [vmem:[%s1 + $0xb0] sm:$0xff]
        %v332 = vld [vmem:[%s1 + $0xb8] sm:$0xff]
        %v333 = vld [vmem:[%s1 + $0xc0] sm:$0xff]
        %v334 = vld [vmem:[%s1 + $0xc8] sm:$0xff]
        %v335 = vld [vmem:[%s1 + $0xd0] sm:$0xff]
        %v336 = vld [vmem:[%s1 + $0xd8] sm:$0xff]
        %v337 = vld [vmem:[%s1 + $0xe0] sm:$0xff]
        %v338 = vld [vmem:[%s1 + $0xe8] sm:$0xff]
        %v339 = vld [vmem:[%s1 + $0xf0] sm:$0xff]
        %v340 = vld [vmem:[%s1 + $0xf8] sm:$0xff]
        %341 = vmatpush.msra.mxu0 %v324
        %342 = vmatpush.msra.mxu0 %v323
        %343 = vmatpush.msra.mxu0 %v322
        %344 = vmatpush.msra.mxu0 %v321
        %345 = vmatpush.msra.mxu0 %v320
        %346 = vmatpush.msra.mxu0 %v319
        %347 = vmatpush.msra.mxu0 %v318
        %348 = vmatpush.msra.mxu0 %v317
        %349 = vmatpush.msra.mxu0 %v316
        %350 = vmatpush.msra.mxu0 %v315
        %351 = vmatpush.msra.mxu0 %v314
        %352 = vmatpush.msra.mxu0 %v313
        %353 = vmatpush.msra.mxu0 %v312
        %354 = vmatpush.msra.mxu0 %v311
        %355 = vmatpush.msra.mxu0 %v310
        %356 = vmatpush.msra.mxu0 %v309
        %357 = vmatmul.f32.gmra.mxu0 %v305
        %v358 = vpop.f32.mrf.mxu0
        %v359 = vadd.f32 0.0, %v358
        %360 = vmatmul.f32.gmra.mxu0 %v307
        %v361 = vpop.f32.mrf.mxu0
        %v362 = vadd.f32 0.0, %v361
        %363 = vdwg.mxu0
        %364 = vmatpush.msra.mxu0 %v340
        %365 = vmatpush.msra.mxu0 %v339
        %366 = vmatpush.msra.mxu0 %v338
        %367 = vmatpush.msra.mxu0 %v337
        %368 = vmatpush.msra.mxu0 %v336
        %369 = vmatpush.msra.mxu0 %v335
        %370 = vmatpush.msra.mxu0 %v334
        %371 = vmatpush.msra.mxu0 %v333
        %372 = vmatpush.msra.mxu0 %v332
        %373 = vmatpush.msra.mxu0 %v331
        %374 = vmatpush.msra.mxu0 %v330
        %375 = vmatpush.msra.mxu0 %v329
        %376 = vmatpush.msra.mxu0 %v328
        %377 = vmatpush.msra.mxu0 %v327
        %378 = vmatpush.msra.mxu0 %v326
        %379 = vmatpush.msra.mxu0 %v325
        %380 = vmatmul.f32.gmra.mxu0 %v306
        %v381 = vpop.f32.mrf.mxu0
        %v382 = vadd.f32 %v359, %v381
        %383 = vmatmul.f32.gmra.mxu0 %v308
        %v384 = vpop.f32.mrf.mxu0
        %v385 = vadd.f32 %v362, %v384
        %386 = vdwg.mxu0
        %vm387 = vcmask 64512
        %v388 = vsel %vm387, %v382, 0.0
        %389 = vadd.xlane.f32.xlu0 %v388
        %v390 = vpop.xlane.xlu0 %389
        %v391 = vsel %vm387, %v385, 0.0
        %392 = vadd.xlane.f32.xlu0 %v391
        %v393 = vpop.xlane.xlu0 %392
        %v394 = vld [vmem:[%s2] sm:$0x1]
        %v395 = vmax.f32 %v305, %v306
        %396 = vmax.xlane.f32.xlu0 %v395
        %v397 = vpop.xlane.xlu0 %396
        %v398 = vmax.f32 %v307, %v308
        %399 = vmax.xlane.f32.xlu0 %v398
        %v400 = vpop.xlane.xlu0 %399
        %v401 = vmax.f32 %v305, %v307
        %v402 = vrot.slane %v401, 4
        %v403 = vmax.f32 %v401, %v402
        %v404 = vrot.slane %v403, 2
        %v405 = vmax.f32 %v403, %v404
        %v406 = vrot.slane %v405, 1
        %v407 = vmax.f32 %v405, %v406
        %v408 = vmax.f32 %v306, %v308
        %v409 = vrot.slane %v408, 4
        %v410 = vmax.f32 %v408, %v409
        %v411 = vrot.slane %v410, 2
        %v412 = vmax.f32 %v410, %v411
        %v413 = vrot.slane %v412, 1
        %v414 = vmax.f32 %v412, %v413
        %v415 = vadd.f32 %v390, %v397
        %v416 = vadd.f32 %v393, %v400
        %v417 = vld [vmem:[%s3] sm:$0xff]
        %v418 = vld [vmem:[%s3 + $0x8] sm:$0xff]
        %v421 = vlaneseq
        %v422 = vand.u32 %v421, 127
        %v423 = vperm.slane %v415, %v422
        %v424 = vadd.s32 %v422, 4294967288
        %v425 = vperm.slane %v416, %v424
        %vm426 = vcmask 130112
        %v427 = vsel %vm426, %v425, %v423
        %vm428 = vcmask 130048
        %v429 = vsel %vm428, %v427, 0
        %431 = vmatpush.msra.mxu0 0.0
        %432 = vmatpush.msra.mxu0 0.0
        %433 = vmatpush.msra.mxu0 0.0
        %434 = vmatpush.msra.mxu0 0.0
        %435 = vmatpush.msra.mxu0 0.0
        %436 = vmatpush.msra.mxu0 0.0
        %437 = vmatpush.msra.mxu0 0.0
        %438 = vmatpush.msra.mxu0 0.0
        %439 = vmatpush.msra.mxu0 0.0
        %440 = vmatpush.msra.mxu0 0.0
        %441 = vmatpush.msra.mxu0 0.0
        %442 = vmatpush.msra.mxu0 0.0
        %443 = vmatpush.msra.mxu0 0.0
        %444 = vmatpush.msra.mxu0 0.0
        %445 = vmatpush.msra.mxu0 %v418
        %446 = vmatpush.msra.mxu0 %v417
        %447 = vmatmul.f32.gmra.mxu0 %v429
        %v448 = vpop.f32.mrf.mxu0
        %v449 = vadd.f32 0.0, %v448
        %450 = vdwg.mxu0
        %v451 = vmax.f32 %v449, 0.0
        %v452 = vld [vmem:[%s4] sm:$0xf]
        %vm453 = vcmask 31744
        %v455 = vsel %vm453, %v451, 0
        %vm457 = vcmask 1043456
        %v459 = vsel %vm457, %v452, 0
        %461 = vmatpush.msra.mxu0 0.0
        %462 = vmatpush.msra.mxu0 0.0
        %463 = vmatpush.msra.mxu0 0.0
        %464 = vmatpush.msra.mxu0 0.0
        %465 = vmatpush.msra.mxu0 0.0
        %466 = vmatpush.msra.mxu0 0.0
        %467 = vmatpush.msra.mxu0 0.0
        %468 = vmatpush.msra.mxu0 0.0
        %469 = vmatpush.msra.mxu0 0.0
        %470 = vmatpush.msra.mxu0 0.0
        %471 = vmatpush.msra.mxu0 0.0
        %472 = vmatpush.msra.mxu0 0.0
        %473 = vmatpush.msra.mxu0 0.0
        %474 = vmatpush.msra.mxu0 0.0
        %475 = vmatpush.msra.mxu0 0.0
        %476 = vmatpush.msra.mxu0 %v459
        %477 = vmatmul.f32.gmra.mxu0 %v455
        %v478 = vpop.f32.mrf.mxu0
        %v479 = vadd.f32 0.0, %v478
        %480 = vdwg.mxu0
        %v481 = vxor.u32 %v479, 2147483648
        %v482 = vmul.f32 %v481, 1.442695
        %v483 = vpow.pop %v482
        %v484 = vadd.f32 %v483, 1.0
        %v485 = vrcp.pop %v484
        %v486 = vmul.f32 %v484, %v485
        %v487 = vsub.f32 1.0, %v486
        %v488 = vmul.f32 %v485, %v487
        %v489 = vadd.f32 %v485, %v488
        %vm490 = vweird.f32 %v484
        %vm491 = vweird.f32 %v485
        %vm492 = vmor %vm490, %vm491
        %v493 = vsel %vm492, %v485, %v489
        %v494 = vand.u32 2147483647, %v484
        %vm495 = vcmp.eq.f32.partialorder %v494, 8.507059e+37
        %v496 = vand.u32 %v484, 2147483648
        %v497 = vor.u32 1.1754944e-38, %v496
        %v498 = vsel %vm495, %v497, %v493
        %v499 = vmul.f32 1.0, %v498
        %v500 = vperm.slane %v499, 0
        %v501 = vlaneseq
        %v502 = vshrl.u32 %v501, 7
        %504 = vset.pattern.permute.xlu0 %v502
        %505 = vperm.xlu0 %504, %v500
        %v506 = vpop.permute.xlu0 %505
        %v507 = vlaneseq
        %v508 = vshrl.u32 %v507, 7
        %v509 = vadd.s32 %v508, 8
        %510 = vset.pattern.permute.xlu0 %v509
        %511 = vperm.xlu0 %510, %v500
        %v512 = vpop.permute.xlu0 %511
        %v514 = vsel %vm428, %v394, 0
        %516 = vmatpush.msra.mxu0 0.0
        %517 = vmatpush.msra.mxu0 0.0
        %518 = vmatpush.msra.mxu0 0.0
        %519 = vmatpush.msra.mxu0 0.0
        %520 = vmatpush.msra.mxu0 0.0
        %521 = vmatpush.msra.mxu0 0.0
        %522 = vmatpush.msra.mxu0 0.0
        %523 = vmatpush.msra.mxu0 0.0
        %524 = vmatpush.msra.mxu0 0.0
        %525 = vmatpush.msra.mxu0 0.0
        %526 = vmatpush.msra.mxu0 0.0
        %527 = vmatpush.msra.mxu0 0.0
        %528 = vmatpush.msra.mxu0 0.0
        %529 = vmatpush.msra.mxu0 0.0
        %530 = vmatpush.msra.mxu0 %v307
        %531 = vmatpush.msra.mxu0 %v305
        %532 = vmatmul.f32.gmra.mxu0 %v514
        %v533 = vpop.f32.mrf.mxu0
        %v534 = vadd.f32 %v407, %v533
        %535 = vdwg.mxu0
        %536 = vmatpush.msra.mxu0 0.0
        %537 = vmatpush.msra.mxu0 0.0
        %538 = vmatpush.msra.mxu0 0.0
        %539 = vmatpush.msra.mxu0 0.0
        %540 = vmatpush.msra.mxu0 0.0
        %541 = vmatpush.msra.mxu0 0.0
        %542 = vmatpush.msra.mxu0 0.0
        %543 = vmatpush.msra.mxu0 0.0
        %544 = vmatpush.msra.mxu0 0.0
        %545 = vmatpush.msra.mxu0 0.0
        %546 = vmatpush.msra.mxu0 0.0
        %547 = vmatpush.msra.mxu0 0.0
        %548 = vmatpush.msra.mxu0 0.0
        %549 = vmatpush.msra.mxu0 0.0
        %550 = vmatpush.msra.mxu0 %v308
        %551 = vmatpush.msra.mxu0 %v306
        %552 = vmatmul.f32.gmra.mxu0 %v514
        %v553 = vpop.f32.mrf.mxu0
        %v554 = vadd.f32 %v414, %v553
        %555 = vdwg.mxu0
        %s556 = sld [smem:[#allocation2]]
        %v557 = vstv %s556
        %558 = vrot.lane.b32.xlu0 %v534, 34
        %v559 = vpop.permute.xlu0 %558
        %560 = vrot.lane.b32.xlu0 %v554, 34
        %v561 = vpop.permute.xlu0 %560
        %vm562 = vcmp.lt.s32.totalorder %v422, 34
        %v563 = vsel %vm562, %v559, %v561
        %v564 = vsel %vm562, %v561, %v559
        %v565 = vld [vmem:[%s5] ss:$8 sm:$0x3]
        %v568 = vrot.slane %v563, 7
        %vm569 = vcmask 1040384
        %v570 = vsel %vm569, %v564, %v568
        %v572 = vmul.f32 %v565, %v570
        %v573 = vadd.f32 %v557, %v572
        %574 = vrot.lane.b32.xlu0 %v534, 33
        %v575 = vpop.permute.xlu0 %574
        %576 = vrot.lane.b32.xlu0 %v554, 33
        %v577 = vpop.permute.xlu0 %576
        %vm578 = vcmp.lt.s32.totalorder %v422, 33
        %v579 = vsel %vm578, %v575, %v577
        %v580 = vsel %vm578, %v577, %v575
        %s581 = scalar_lea.vmem %s5, 1
        %v582 = vld [vmem:[%s581] ss:$8 sm:$0x3]
        %v585 = vrot.slane %v579, 7
        %v586 = vsel %vm569, %v580, %v585
        %v588 = vmul.f32 %v582, %v586
        %v589 = vadd.f32 %v573, %v588
        %590 = vrot.lane.b32.xlu0 %v534, 32
        %v591 = vpop.permute.xlu0 %590
        %592 = vrot.lane.b32.xlu0 %v554, 32
        %v593 = vpop.permute.xlu0 %592
        %vm594 = vcmp.lt.s32.totalorder %v422, 32
        %v595 = vsel %vm594, %v591, %v593
        %v596 = vsel %vm594, %v593, %v591
        %s597 = scalar_lea.vmem %s5, 2
        %v598 = vld [vmem:[%s597] ss:$8 sm:$0x3]
        %v601 = vrot.slane %v595, 7
        %v602 = vsel %vm569, %v596, %v601
        %v604 = vmul.f32 %v598, %v602
        %v605 = vadd.f32 %v589, %v604
        %606 = vrot.lane.b32.xlu0 %v534, 31
        %v607 = vpop.permute.xlu0 %606
        %608 = vrot.lane.b32.xlu0 %v554, 31
        %v609 = vpop.permute.xlu0 %608
        %vm610 = vcmp.lt.s32.totalorder %v422, 31
        %v611 = vsel %vm610, %v607, %v609
        %v612 = vsel %vm610, %v609, %v607
        %s613 = scalar_lea.vmem %s5, 3
        %v614 = vld [vmem:[%s613] ss:$8 sm:$0x3]
        %v617 = vrot.slane %v611, 7
        %v618 = vsel %vm569, %v612, %v617
        %v620 = vmul.f32 %v614, %v618
        %v621 = vadd.f32 %v605, %v620
        %622 = vrot.lane.b32.xlu0 %v534, 30
        %v623 = vpop.permute.xlu0 %622
        %624 = vrot.lane.b32.xlu0 %v554, 30
        %v625 = vpop.permute.xlu0 %624
        %vm626 = vcmp.lt.s32.totalorder %v422, 30
        %v627 = vsel %vm626, %v623, %v625
        %v628 = vsel %vm626, %v625, %v623
        %s629 = scalar_lea.vmem %s5, 4
        %v630 = vld [vmem:[%s629] ss:$8 sm:$0x3]
        %v633 = vrot.slane %v627, 7
        %v634 = vsel %vm569, %v628, %v633
        %v636 = vmul.f32 %v630, %v634
        %v637 = vadd.f32 %v621, %v636
        %638 = vrot.lane.b32.xlu0 %v534, 18
        %v639 = vpop.permute.xlu0 %638
        %640 = vrot.lane.b32.xlu0 %v554, 18
        %v641 = vpop.permute.xlu0 %640
        %vm642 = vcmp.lt.s32.totalorder %v422, 18
        %v643 = vsel %vm642, %v639, %v641
        %v644 = vsel %vm642, %v641, %v639
        %s645 = scalar_lea.vmem %s5, 5
        %v646 = vld [vmem:[%s645] ss:$8 sm:$0x3]
        %v649 = vrot.slane %v643, 7
        %v650 = vsel %vm569, %v644, %v649
        %v652 = vmul.f32 %v646, %v650
        %v653 = vadd.f32 %v637, %v652
        %654 = vrot.lane.b32.xlu0 %v534, 17
        %v655 = vpop.permute.xlu0 %654
        %656 = vrot.lane.b32.xlu0 %v554, 17
        %v657 = vpop.permute.xlu0 %656
        %vm658 = vcmp.lt.s32.totalorder %v422, 17
        %v659 = vsel %vm658, %v655, %v657
        %v660 = vsel %vm658, %v657, %v655
        %s661 = scalar_lea.vmem %s5, 6
        %v662 = vld [vmem:[%s661] ss:$8 sm:$0x3]
        %v665 = vrot.slane %v659, 7
        %v666 = vsel %vm569, %v660, %v665
        %v668 = vmul.f32 %v662, %v666
        %v669 = vadd.f32 %v653, %v668
        %670 = vrot.lane.b32.xlu0 %v534, 16
        %v671 = vpop.permute.xlu0 %670
        %672 = vrot.lane.b32.xlu0 %v554, 16
        %v673 = vpop.permute.xlu0 %672
        %vm674 = vcmp.lt.s32.totalorder %v422, 16
        %v675 = vsel %vm674, %v671, %v673
        %v676 = vsel %vm674, %v673, %v671
        %s677 = scalar_lea.vmem %s5, 7
        %v678 = vld [vmem:[%s677] ss:$8 sm:$0x3]
        %v681 = vrot.slane %v675, 7
        %v682 = vsel %vm569, %v676, %v681
        %v684 = vmul.f32 %v678, %v682
        %v685 = vadd.f32 %v669, %v684
        %686 = vrot.lane.b32.xlu0 %v534, 15
        %v687 = vpop.permute.xlu0 %686
        %688 = vrot.lane.b32.xlu0 %v554, 15
        %v689 = vpop.permute.xlu0 %688
        %vm690 = vcmp.lt.s32.totalorder %v422, 15
        %v691 = vsel %vm690, %v687, %v689
        %v692 = vsel %vm690, %v689, %v687
        %s693 = scalar_lea.vmem %s5, 16
        %v694 = vld [vmem:[%s693] ss:$8 sm:$0x3]
        %v697 = vrot.slane %v691, 7
        %v698 = vsel %vm569, %v692, %v697
        %v700 = vmul.f32 %v694, %v698
        %v701 = vadd.f32 %v685, %v700
        %702 = vrot.lane.b32.xlu0 %v534, 14
        %v703 = vpop.permute.xlu0 %702
        %704 = vrot.lane.b32.xlu0 %v554, 14
        %v705 = vpop.permute.xlu0 %704
        %vm706 = vcmp.lt.s32.totalorder %v422, 14
        %v707 = vsel %vm706, %v703, %v705
        %v708 = vsel %vm706, %v705, %v703
        %s709 = scalar_lea.vmem %s5, 17
        %v710 = vld [vmem:[%s709] ss:$8 sm:$0x3]
        %v713 = vrot.slane %v707, 7
        %v714 = vsel %vm569, %v708, %v713
        %v716 = vmul.f32 %v710, %v714
        %v717 = vadd.f32 %v701, %v716
        %718 = vrot.lane.b32.xlu0 %v534, 2
        %v719 = vpop.permute.xlu0 %718
        %720 = vrot.lane.b32.xlu0 %v554, 2
        %v721 = vpop.permute.xlu0 %720
        %vm722 = vcmp.lt.s32.totalorder %v422, 2
        %v723 = vsel %vm722, %v719, %v721
        %v724 = vsel %vm722, %v721, %v719
        %s725 = scalar_lea.vmem %s5, 18
        %v726 = vld [vmem:[%s725] ss:$8 sm:$0x3]
        %v729 = vrot.slane %v723, 7
        %v730 = vsel %vm569, %v724, %v729
        %v732 = vmul.f32 %v726, %v730
        %v733 = vadd.f32 %v717, %v732
        %734 = vrot.lane.b32.xlu0 %v534, 1
        %v735 = vpop.permute.xlu0 %734
        %736 = vrot.lane.b32.xlu0 %v554, 1
        %v737 = vpop.permute.xlu0 %736
        %vm738 = vcmp.lt.s32.totalorder %v422, 1
        %v739 = vsel %vm738, %v735, %v737
        %v740 = vsel %vm738, %v737, %v735
        %s741 = scalar_lea.vmem %s5, 19
        %v742 = vld [vmem:[%s741] ss:$8 sm:$0x3]
        %v745 = vrot.slane %v739, 7
        %v746 = vsel %vm569, %v740, %v745
        %v748 = vmul.f32 %v742, %v746
        %v749 = vadd.f32 %v733, %v748
        %s750 = scalar_lea.vmem %s5, 20
        %v751 = vld [vmem:[%s750] ss:$8 sm:$0x3]
        %v754 = vrot.slane %v554, 7
        %v755 = vsel %vm569, %v534, %v754
        %v757 = vmul.f32 %v751, %v755
        %v758 = vadd.f32 %v749, %v757
        %759 = vrot.lane.b32.xlu0 %v534, 127
        %v760 = vpop.permute.xlu0 %759
        %761 = vrot.lane.b32.xlu0 %v554, 127
        %v762 = vpop.permute.xlu0 %761
        %vm763 = vcmp.lt.s32.totalorder %v422, 127
        %v764 = vsel %vm763, %v760, %v762
        %v765 = vsel %vm763, %v762, %v760
        %s766 = scalar_lea.vmem %s5, 21
        %v767 = vld [vmem:[%s766] ss:$8 sm:$0x3]
        %v770 = vrot.slane %v765, 7
        %v771 = vsel %vm569, %v764, %v770
        %v773 = vmul.f32 %v767, %v771
        %v774 = vadd.f32 %v758, %v773
        %775 = vrot.lane.b32.xlu0 %v534, 126
        %v776 = vpop.permute.xlu0 %775
        %777 = vrot.lane.b32.xlu0 %v554, 126
        %v778 = vpop.permute.xlu0 %777
        %vm779 = vcmp.lt.s32.totalorder %v422, 126
        %v780 = vsel %vm779, %v776, %v778
        %v781 = vsel %vm779, %v778, %v776
        %s782 = scalar_lea.vmem %s5, 22
        %v783 = vld [vmem:[%s782] ss:$8 sm:$0x3]
        %v786 = vrot.slane %v781, 7
        %v787 = vsel %vm569, %v780, %v786
        %v789 = vmul.f32 %v783, %v787
        %v790 = vadd.f32 %v774, %v789
        %791 = vrot.lane.b32.xlu0 %v534, 114
        %v792 = vpop.permute.xlu0 %791
        %793 = vrot.lane.b32.xlu0 %v554, 114
        %v794 = vpop.permute.xlu0 %793
        %vm795 = vcmp.lt.s32.totalorder %v422, 114
        %v796 = vsel %vm795, %v792, %v794
        %v797 = vsel %vm795, %v794, %v792
        %s798 = scalar_lea.vmem %s5, 23
        %v799 = vld [vmem:[%s798] ss:$8 sm:$0x3]
        %v802 = vrot.slane %v797, 7
        %v803 = vsel %vm569, %v796, %v802
        %v805 = vmul.f32 %v799, %v803
        %v806 = vadd.f32 %v790, %v805
        %807 = vrot.lane.b32.xlu0 %v534, 113
        %v808 = vpop.permute.xlu0 %807
        %809 = vrot.lane.b32.xlu0 %v554, 113
        %v810 = vpop.permute.xlu0 %809
        %vm811 = vcmp.lt.s32.totalorder %v422, 113
        %v812 = vsel %vm811, %v808, %v810
        %v813 = vsel %vm811, %v810, %v808
        %s814 = scalar_lea.vmem %s5, 32
        %v815 = vld [vmem:[%s814] ss:$8 sm:$0x3]
        %v818 = vrot.slane %v813, 7
        %v819 = vsel %vm569, %v812, %v818
        %v821 = vmul.f32 %v815, %v819
        %v822 = vadd.f32 %v806, %v821
        %823 = vrot.lane.b32.xlu0 %v534, 112
        %v824 = vpop.permute.xlu0 %823
        %825 = vrot.lane.b32.xlu0 %v554, 112
        %v826 = vpop.permute.xlu0 %825
        %vm827 = vcmp.lt.s32.totalorder %v422, 112
        %v828 = vsel %vm827, %v824, %v826
        %v829 = vsel %vm827, %v826, %v824
        %s830 = scalar_lea.vmem %s5, 33
        %v831 = vld [vmem:[%s830] ss:$8 sm:$0x3]
        %v834 = vrot.slane %v829, 7
        %v835 = vsel %vm569, %v828, %v834
        %v837 = vmul.f32 %v831, %v835
        %v838 = vadd.f32 %v822, %v837
        %839 = vrot.lane.b32.xlu0 %v534, 111
        %v840 = vpop.permute.xlu0 %839
        %841 = vrot.lane.b32.xlu0 %v554, 111
        %v842 = vpop.permute.xlu0 %841
        %vm843 = vcmp.lt.s32.totalorder %v422, 111
        %v844 = vsel %vm843, %v840, %v842
        %v845 = vsel %vm843, %v842, %v840
        %s846 = scalar_lea.vmem %s5, 34
        %v847 = vld [vmem:[%s846] ss:$8 sm:$0x3]
        %v850 = vrot.slane %v845, 7
        %v851 = vsel %vm569, %v844, %v850
        %v853 = vmul.f32 %v847, %v851
        %v854 = vadd.f32 %v838, %v853
        %855 = vrot.lane.b32.xlu0 %v534, 110
        %v856 = vpop.permute.xlu0 %855
        %857 = vrot.lane.b32.xlu0 %v554, 110
        %v858 = vpop.permute.xlu0 %857
        %vm859 = vcmp.lt.s32.totalorder %v422, 110
        %v860 = vsel %vm859, %v856, %v858
        %v861 = vsel %vm859, %v858, %v856
        %s862 = scalar_lea.vmem %s5, 35
        %v863 = vld [vmem:[%s862] ss:$8 sm:$0x3]
        %v866 = vrot.slane %v861, 7
        %v867 = vsel %vm569, %v860, %v866
        %v869 = vmul.f32 %v863, %v867
        %v870 = vadd.f32 %v854, %v869
        %871 = vrot.lane.b32.xlu0 %v534, 98
        %v872 = vpop.permute.xlu0 %871
        %873 = vrot.lane.b32.xlu0 %v554, 98
        %v874 = vpop.permute.xlu0 %873
        %vm875 = vcmp.lt.s32.totalorder %v422, 98
        %v876 = vsel %vm875, %v872, %v874
        %v877 = vsel %vm875, %v874, %v872
        %s878 = scalar_lea.vmem %s5, 36
        %v879 = vld [vmem:[%s878] ss:$8 sm:$0x3]
        %v882 = vrot.slane %v877, 7
        %v883 = vsel %vm569, %v876, %v882
        %v885 = vmul.f32 %v879, %v883
        %v886 = vadd.f32 %v870, %v885
        %887 = vrot.lane.b32.xlu0 %v534, 97
        %v888 = vpop.permute.xlu0 %887
        %889 = vrot.lane.b32.xlu0 %v554, 97
        %v890 = vpop.permute.xlu0 %889
        %vm891 = vcmp.lt.s32.totalorder %v422, 97
        %v892 = vsel %vm891, %v888, %v890
        %v893 = vsel %vm891, %v890, %v888
        %s894 = scalar_lea.vmem %s5, 37
        %v895 = vld [vmem:[%s894] ss:$8 sm:$0x3]
        %v898 = vrot.slane %v893, 7
        %v899 = vsel %vm569, %v892, %v898
        %v901 = vmul.f32 %v895, %v899
        %v902 = vadd.f32 %v886, %v901
        %903 = vrot.lane.b32.xlu0 %v534, 96
        %v904 = vpop.permute.xlu0 %903
        %905 = vrot.lane.b32.xlu0 %v554, 96
        %v906 = vpop.permute.xlu0 %905
        %vm907 = vcmp.lt.s32.totalorder %v422, 96
        %v908 = vsel %vm907, %v904, %v906
        %v909 = vsel %vm907, %v906, %v904
        %s910 = scalar_lea.vmem %s5, 38
        %v911 = vld [vmem:[%s910] ss:$8 sm:$0x3]
        %v914 = vrot.slane %v909, 7
        %v915 = vsel %vm569, %v908, %v914
        %v917 = vmul.f32 %v911, %v915
        %v918 = vadd.f32 %v902, %v917
        %919 = vrot.lane.b32.xlu0 %v534, 95
        %v920 = vpop.permute.xlu0 %919
        %921 = vrot.lane.b32.xlu0 %v554, 95
        %v922 = vpop.permute.xlu0 %921
        %vm923 = vcmp.lt.s32.totalorder %v422, 95
        %v924 = vsel %vm923, %v920, %v922
        %v925 = vsel %vm923, %v922, %v920
        %s926 = scalar_lea.vmem %s5, 39
        %v927 = vld [vmem:[%s926] ss:$8 sm:$0x3]
        %v930 = vrot.slane %v925, 7
        %v931 = vsel %vm569, %v924, %v930
        %v933 = vmul.f32 %v927, %v931
        %v934 = vadd.f32 %v918, %v933
        %935 = vrot.lane.b32.xlu0 %v534, 94
        %v936 = vpop.permute.xlu0 %935
        %937 = vrot.lane.b32.xlu0 %v554, 94
        %v938 = vpop.permute.xlu0 %937
        %vm939 = vcmp.lt.s32.totalorder %v422, 94
        %v940 = vsel %vm939, %v936, %v938
        %v941 = vsel %vm939, %v938, %v936
        %s942 = scalar_lea.vmem %s5, 48
        %v943 = vld [vmem:[%s942] ss:$8 sm:$0x3]
        %v946 = vrot.slane %v941, 7
        %v947 = vsel %vm569, %v940, %v946
        %v949 = vmul.f32 %v943, %v947
        %v950 = vadd.f32 %v934, %v949
        %v951 = vxor.u32 %v950, 2147483648
        %v952 = vmul.f32 %v951, 1.442695
        %v953 = vpow.pop %v952
        %v954 = vadd.f32 %v953, 1.0
        %v955 = vrcp.pop %v954
        %v956 = vmul.f32 %v954, %v955
        %v957 = vsub.f32 1.0, %v956
        %v958 = vmul.f32 %v955, %v957
        %v959 = vadd.f32 %v955, %v958
        %vm960 = vweird.f32 %v954
        %vm961 = vweird.f32 %v955
        %vm962 = vmor %vm960, %vm961
        %v963 = vsel %vm962, %v955, %v959
        %v964 = vand.u32 2147483647, %v954
        %vm965 = vcmp.eq.f32.partialorder %v964, 8.507059e+37
        %v966 = vand.u32 %v954, 2147483648
        %v967 = vor.u32 1.1754944e-38, %v966
        %v968 = vsel %vm965, %v967, %v963
        %v969 = vmul.f32 1.0, %v968
        %v970 = vadd.f32 %v506, 1.0
        %v971 = vadd.f32 %v512, 1.0
        %v973 = vperm.slane %v969, 0
        %v974 = vperm.slane %v969, 1
        %v977 = vadd.f32 %v970, %v973
        %v978 = vadd.f32 %v970, %v974
        %v979 = vadd.f32 %v971, %v973
        %v980 = vadd.f32 %v971, %v974
        %v981 = vmul.f32 %v305, %v977
        %v982 = vmul.f32 %v306, %v978
        %v983 = vmul.f32 %v307, %v979
        %v984 = vmul.f32 %v308, %v980
        %985 = vst [vmem:[%s299] sm:$0xff] %v981
        %986 = vst [vmem:[%s299 + $0x8] sm:$0xff] %v982
        %987 = vst [vmem:[%s299 + $0x10] sm:$0xff] %v983
        %988 = vst [vmem:[%s299 + $0x18] sm:$0xff] %v984
        %s989 = sand.u32 %s204, 1
        %s990 = scalar_lea.sflag [#allocation4], %s989
        %s991 = sand.u32 %s204, 1
        %s992 = smul.addr %s991, 32
        %s993 = scalar_lea.vmem [#allocation3], %s992
        // Predicated region
        $region53: #{tpu_custom_call.1} parent=51 // pred_check
          %p994 = pneg %p214
        $region54: #{tpu_custom_call.1} parent=51 // pred_check_branch
          %996 = sbr.rel (%p994) target = $region56
        $region55: #{tpu_custom_call.1} parent=51 // pred_region
          %998 = vsyncadd %s990, 0
          %s999 = smul.addr %s23, 4
          %s1000 = smul.addr %s999, 8
          %s1001 = scalar_lea.hbm %s8, %s1000
          %s1002 = sshll.u32 %s993, 4
          %s1003 = int_to_ptr.vmem [resolvable:$true] %s1002
          %s1004 = sshll.u32 %s1001, 4
          %s1005 = int_to_ptr.hbm [resolvable:$true] %s1004
          %1010 = dma.vmem_to_hbm [thread:$0]  %s1003, 512, %s1005, %s990, 256, 256, 16
        $region56: #{tpu_custom_call.1} parent=51 // pred_fallthru
          _
      $region52: #{tpu_custom_call.1} parent=5 // pred_fallthru
        _
      %p1011 = scmp.le.s32.totalorder 2, %s18
      // Predicated region
      $region57: #{tpu_custom_call.1} parent=5 // pred_check
        %p1012 = pneg %p1011
      $region58: #{tpu_custom_call.1} parent=5 // pred_check_branch
        %1014 = sbr.rel (%p1012) target = $region60
      $region59: #{tpu_custom_call.1} parent=5 // pred_region
        %s1015 = ssub.s32 %s18, 2
        // Predicated region
        $region61: #{tpu_custom_call.1} parent=59 // pred_check
          %p1016 = pneg %p220
        $region62: #{tpu_custom_call.1} parent=59 // pred_check_branch
          %1018 = sbr.rel (%p1016) target = $region64
        $region63: #{tpu_custom_call.1} parent=59 // pred_region
          %s1019 = sand.u32 %s205, 1
          %s1020 = scalar_lea.sflag [#allocation4], %s1019
          %s1021 = sand.u32 %s205, 1
          %s1022 = smul.addr %s1021, 32
          %s1023 = scalar_lea.vmem [#allocation3], %s1022
          %1025 = dma.done %s1020, 512
        $region64: #{tpu_custom_call.1} parent=59 // pred_fallthru
          _
      $region60: #{tpu_custom_call.1} parent=5 // pred_fallthru
        _
    $region6: #{tpu_custom_call.1} parent=1 // loop_footer
      %s22 = sadd.s32 1, %s18
    $region7: #{tpu_custom_call.1} parent=1 // loop_footer_branch
      %17 = sbr.rel target = $region3
    $region8: #{tpu_custom_call.1} parent=1 // loop_exit
      _
    %1026 = vsyncpa [#allocation4], 1
    %s1027 = scalar_lea.sflag [#allocation4], 1
    %1028 = vsyncpa %s1027, 1

</llo_original>
